<compile_context>
chip_gen: v7x
topology: tpu7x:2x2x1
jax: 0.10.0
libtpu: 0.0.40
codegen_flags: <defaults>
</compile_context>

<pallas_src>
import math
from functools import reduce
from operator import mul

import jax
import jax.numpy as jnp
from jax.experimental import pallas as pl
from jax.experimental.pallas import tpu as pltpu


_G_CAP = 16                     # max indices gathered per grid step (unroll / DMA fan-out)
_BLOCK_TARGET_BYTES = 2 << 20   # target gathered bytes per grid step
_DEFAULT_VMEM_CAP = 64 << 20    # conservative fallback (v7x per-TensorCore VMEM)


def _round_up(x, m):
    return -(-x // m) * m


def _tiled_bytes(shape, itemsize):
    """Approximate VMEM footprint of a 3-D buffer with (8, 128) tiling."""
    s = list(shape)
    s[-1] = _round_up(s[-1], 128)
    s[-2] = _round_up(s[-2], 8)
    nbytes = itemsize
    for d in s:
        nbytes *= d
    return nbytes


def _vmem_capacity_bytes():
    try:
        return int(pltpu.get_tpu_info().vmem_capacity_bytes)
    except Exception:
        return _DEFAULT_VMEM_CAP


def _make_resident_kernel(g_per_step):
    def kernel(idx_ref, table_hbm, o_ref, table_vmem, sem):
        # Load the whole prompt table HBM -> VMEM exactly once (grid is
        # sequential / "arbitrary").  The scratch is single-buffered, unlike a
        # pipelined BlockSpec block which would reserve 2x the table bytes.
        @pl.when(pl.program_id(0) == 0)
        def _load_table():
            cp = pltpu.make_async_copy(table_hbm, table_vmem, sem.at[0])
            cp.start()
            cp.wait()

        base = pl.program_id(0) * g_per_step
        for g in range(g_per_step):           # static unroll, g_per_step <= _G_CAP
            e = idx_ref[base + g]             # scalar-prefetched index (SMEM)
            o_ref[:, g, :] = table_vmem[e]    # dynamic leading-axis VMEM gather
    return kernel


def _make_stream_kernel(g_per_step):
    def kernel(idx_ref, table_hbm, o_ref, buf, sems):
        base = pl.program_id(0) * g_per_step
        # Issue all G gather DMAs first so they are in flight concurrently
        # (this regime is DMA-latency bound, not bandwidth bound).
        for g in range(g_per_step):
            e = idx_ref[base + g]
            pltpu.make_async_copy(table_hbm.at[e], buf.at[g], sems.at[g]).start()
        for g in range(g_per_step):
            e = idx_ref[base + g]
            pltpu.make_async_copy(table_hbm.at[e], buf.at[g], sems.at[g]).wait()
        for g in range(g_per_step):
            o_ref[:, g, :] = buf[g]
    return kernel


def prompt_pool_forward(prompts, indices, *, table_resident=None):
    """prompts: (E, depth, num, dim); indices: (b, k) integer.
    Returns (depth, b, k*num, dim) -- matches PromptPool.forward."""
    num_entries, depth, num_per_slot, embed_dim = prompts.shape
    b, k = indices.shape
    n = b * k
    row = num_per_slot * embed_dim            # merged lane-dense trailing axis
    itemsize = jnp.dtype(prompts.dtype).itemsize

    # NOTE: out-of-range top-k indices are clamped (the PyTorch reference would
    # fault / read garbage); documented, deliberate divergence for robustness.
    flat_idx = jnp.clip(indices.reshape(n).astype(jnp.int32), 0, num_entries - 1)

    # Merge (num, dim) -> num*dim: contiguous, free.  For best perf `row`
    # should be a multiple of 128 (true whenever embed_dim is); otherwise the
    # last lane tile uses masked stores but everything stays correct.
    table = prompts.reshape(num_entries, depth, row)

    # ---- choose G = indices gathered per grid step -------------------------
    bytes_per_idx = depth * row * itemsize
    g_by_bytes = max(8, (_BLOCK_TARGET_BYTES // max(bytes_per_idx, 1)) // 8 * 8)
    g_per_step = int(min(_G_CAP, g_by_bytes))
    if n <= g_per_step:
        g_per_step, n_pad = n, n              # one step; full-dim block, no padding
    else:
        n_pad = _round_up(n, g_per_step)
    grid = (n_pad // g_per_step,)

    if n_pad != n:
        flat_idx = jnp.pad(flat_idx, (0, n_pad - n))   # pad with valid index 0

    # ---- resident vs streaming (generation-aware VMEM budget) --------------
    vmem_cap = _vmem_capacity_bytes()
    out_block_vmem = 2 * _tiled_bytes((depth, g_per_step, row), itemsize)  # 2x: pipelined
    table_vmem_bytes = _tiled_bytes((num_entries, depth, row), itemsize)
    stream_buf_vmem = _tiled_bytes((g_per_step, depth, row), itemsize)
    if table_resident is None:
        table_resident = (table_vmem_bytes + out_block_vmem + (1 << 20)
                          <= int(0.6 * vmem_cap))

    if table_resident:
        kernel = _make_resident_kernel(g_per_step)
        scratch_shapes = [
            pltpu.VMEM((num_entries, depth, row), prompts.dtype),
            pltpu.SemaphoreType.DMA((1,)),
        ]
        # Sequential grid: the step-0 table load must precede every step, and
        # this avoids duplicating the table load across v7x's 2 TensorCores.
        dim_semantics = ("arbitrary",)
        vmem_needed = table_vmem_bytes + out_block_vmem + (2 << 20)
        bytes_accessed = ((num_entries + n_pad) * depth * row) * itemsize + 4 * n_pad
    else:
        kernel = _make_stream_kernel(g_per_step)
        scratch_shapes = [
            pltpu.VMEM((g_per_step, depth, row), prompts.dtype),
            pltpu.SemaphoreType.DMA((g_per_step,)),
        ]
        dim_semantics = ("parallel",)         # no cross-step state; v7x may split
        vmem_needed = stream_buf_vmem + out_block_vmem + (2 << 20)
        bytes_accessed = 2 * n_pad * depth * row * itemsize + 4 * n_pad

    vmem_limit = int(min(max(vmem_needed, 16 << 20), int(0.92 * vmem_cap)))

    out = pl.pallas_call(
        kernel,
        out_shape=jax.ShapeDtypeStruct((depth, n_pad, row), prompts.dtype),
        grid_spec=pltpu.PrefetchScalarGridSpec(
            num_scalar_prefetch=1,
            grid=grid,
            in_specs=[pl.BlockSpec(memory_space=pl.ANY)],    # table stays in HBM
            out_specs=pl.BlockSpec((depth, g_per_step, row),
                                   lambda i, idx_ref: (0, i, 0)),
            scratch_shapes=scratch_shapes,
        ),
        compiler_params=pltpu.CompilerParams(
            dimension_semantics=dim_semantics,
            vmem_limit_bytes=vmem_limit,
        ),
        cost_estimate=pl.CostEstimate(
            flops=0, transcendentals=0, bytes_accessed=int(bytes_accessed)),
    )(flat_idx, table)

    if n_pad != n:
        out = out[:, :n, :]
    # (depth, b*k, num*dim) -> (depth, b, k*num, dim): pure reshape of adjacent
    # axes (k, num) and (num, dim) -- no transpose pass over the output.
    return out.reshape(depth, b, k * num_per_slot, embed_dim)


def make_prompt_pool_params(key, num_entries, depth, num_per_slot, embed_dim,
                            patch_size):
    # Matches PromptPool._init_prompt: uniform(-val, val).
    val = math.sqrt(6.0 / float(3 * reduce(mul, patch_size, 1) + embed_dim))
    return jax.random.uniform(
        key, (num_entries, depth, num_per_slot, embed_dim),
        dtype=jnp.float32, minval=-val, maxval=val)


def _reference(prompts, indices):
    b, k = indices.shape
    depth = prompts.shape[1]
    num_per_slot, embed_dim = prompts.shape[2], prompts.shape[3]
    flat = indices.reshape(-1)
    ref = prompts[flat].reshape(b, k, depth, num_per_slot, embed_dim)
    return jnp.transpose(ref, (2, 0, 1, 3, 4)).reshape(
        depth, b, k * num_per_slot, embed_dim)


if __name__ == "__main__":
    num_entries = 10
    depth = 3
    num_per_slot = 4
    embed_dim = 32          # num_per_slot * embed_dim = 128 -> full lane tile
    patch_size = (16, 16)

    key = jax.random.PRNGKey(0)
    kp, ki1, ki2 = jax.random.split(key, 3)
    prompts = make_prompt_pool_params(
        kp, num_entries, depth, num_per_slot, embed_dim, patch_size)

    # Case 1: small batch (single grid step, no padding).
    idx_a = jax.random.randint(ki1, (2, 5), 0, num_entries, dtype=jnp.int32)
    # Case 2: larger batch (multi-step grid, index padding + output slice).
    idx_b = jax.random.randint(ki2, (3, 7), 0, num_entries, dtype=jnp.int32)

    for indices in (idx_a, idx_b):
        b, k = indices.shape
        ref = _reference(prompts, indices)
        out_resident = jax.block_until_ready(
            prompt_pool_forward(prompts, indices, table_resident=True))
        out_stream = jax.block_until_ready(
            prompt_pool_forward(prompts, indices, table_resident=False))
        for out in (out_resident, out_stream):
            assert out.shape == (depth, b, k * num_per_slot, embed_dim)
            assert jnp.allclose(out, ref), "Pallas gather mismatch vs reference"

    print("KERNEL_OK")
</pallas_src>

<mosaic_0001>
module attributes {stable_mosaic.version = 11 : i64} {
  func.func @kernel(%arg0: i32, %arg1: memref<10xi32, #tpu.memory_space<smem>>, %arg2: memref<10x3x128xf32, #tpu.memory_space<any>>, %arg3: memref<3x10x128xf32, #tpu.memory_space<vmem>>, %arg4: memref<10x3x128xf32, #tpu.memory_space<vmem>>, %arg5: memref<1x!tpu.dma_semaphore, #tpu.memory_space<semaphore_mem>>) attributes {dimension_semantics = [#tpu.dimension_semantics<arbitrary>], iteration_bounds = array<i64: 1>, scalar_prefetch = 1 : i64, scratch_operands = 2 : i64, tpu.core_type = #tpu.core_type<tc>, window_params = [{}, {transform_indices = @transform_1, window_bounds = array<i64: 3, 10, 128>}]} {
    %c0_i32 = arith.constant 0 : i32
    %0 = arith.cmpi eq, %arg0, %c0_i32 : i32
    %1 = arith.extui %0 : i1 to i32
    %c0_i32_0 = arith.constant 0 : i32
    %2 = arith.cmpi ne, %1, %c0_i32_0 : i32
    scf.if %2 {
      %c0_i32_42 = arith.constant 0 : i32
      %94 = tpu.memref_slice %arg5[%c0_i32_42] : memref<1x!tpu.dma_semaphore, #tpu.memory_space<semaphore_mem>> -> memref<1x!tpu.dma_semaphore, #tpu.memory_space<semaphore_mem>>
      %95 = tpu.memref_squeeze %94 : memref<1x!tpu.dma_semaphore, #tpu.memory_space<semaphore_mem>> -> memref<!tpu.dma_semaphore, #tpu.memory_space<semaphore_mem>>
      tpu.enqueue_dma source(%arg2 : memref<10x3x128xf32, #tpu.memory_space<any>>) target(%arg4 : memref<10x3x128xf32, #tpu.memory_space<vmem>>) target_semaphore(%95 : memref<!tpu.dma_semaphore, #tpu.memory_space<semaphore_mem>>)
      %c0_i32_43 = arith.constant 0 : i32
      %96 = tpu.memref_slice %arg5[%c0_i32_43] : memref<1x!tpu.dma_semaphore, #tpu.memory_space<semaphore_mem>> -> memref<1x!tpu.dma_semaphore, #tpu.memory_space<semaphore_mem>>
      %97 = tpu.memref_squeeze %96 : memref<1x!tpu.dma_semaphore, #tpu.memory_space<semaphore_mem>> -> memref<!tpu.dma_semaphore, #tpu.memory_space<semaphore_mem>>
      tpu.wait_dma2 semaphore(%97 : memref<!tpu.dma_semaphore, #tpu.memory_space<semaphore_mem>>) src(%arg2 : memref<10x3x128xf32, #tpu.memory_space<any>>) dst(%arg4 : memref<10x3x128xf32, #tpu.memory_space<vmem>>)
    } else {
    }
    %c10_i32 = arith.constant 10 : i32
    %3 = arith.muli %arg0, %c10_i32 : i32
    %c0_i32_1 = arith.constant 0 : i32
    %4 = arith.addi %3, %c0_i32_1 : i32
    %5 = arith.index_cast %4 : i32 to index
    %6 = memref.load %arg1[%5] : memref<10xi32, #tpu.memory_space<smem>>
    %7 = arith.index_cast %6 : i32 to index
    %c0 = arith.constant 0 : index
    %c0_2 = arith.constant 0 : index
    %8 = vector.load %arg4[%7, %c0, %c0_2] : memref<10x3x128xf32, #tpu.memory_space<vmem>>, vector<1x3x128xf32>
    %9 = vector.shape_cast %8 : vector<1x3x128xf32> to vector<3x128xf32>
    %c0_3 = arith.constant 0 : index
    %c0_4 = arith.constant 0 : index
    %c0_5 = arith.constant 0 : index
    %10 = vector.load %arg3[%c0_3, %c0_4, %c0_5] : memref<3x10x128xf32, #tpu.memory_space<vmem>>, vector<3x1x128xf32>
    %11 = vector.shape_cast %10 : vector<3x1x128xf32> to vector<3x128xf32>
    %12 = vector.shape_cast %9 : vector<3x128xf32> to vector<3x1x128xf32>
    tpu.vector_store %arg3[%c0_3, %c0_4, %c0_5], %12 {strides = array<i32>} : memref<3x10x128xf32, #tpu.memory_space<vmem>>, vector<3x1x128xf32>,
    %c1_i32 = arith.constant 1 : i32
    %13 = arith.addi %3, %c1_i32 : i32
    %14 = arith.index_cast %13 : i32 to index
    %15 = memref.load %arg1[%14] : memref<10xi32, #tpu.memory_space<smem>>
    %16 = arith.index_cast %15 : i32 to index
    %c0_6 = arith.constant 0 : index
    %c0_7 = arith.constant 0 : index
    %17 = vector.load %arg4[%16, %c0_6, %c0_7] : memref<10x3x128xf32, #tpu.memory_space<vmem>>, vector<1x3x128xf32>
    %18 = vector.shape_cast %17 : vector<1x3x128xf32> to vector<3x128xf32>
    %c0_8 = arith.constant 0 : index
    %c1 = arith.constant 1 : index
    %c0_9 = arith.constant 0 : index
    %19 = vector.load %arg3[%c0_8, %c1, %c0_9] : memref<3x10x128xf32, #tpu.memory_space<vmem>>, vector<3x1x128xf32>
    %20 = vector.shape_cast %19 : vector<3x1x128xf32> to vector<3x128xf32>
    %21 = vector.shape_cast %18 : vector<3x128xf32> to vector<3x1x128xf32>
    tpu.vector_store %arg3[%c0_8, %c1, %c0_9], %21 {strides = array<i32>} : memref<3x10x128xf32, #tpu.memory_space<vmem>>, vector<3x1x128xf32>,
    %c2_i32 = arith.constant 2 : i32
    %22 = arith.addi %3, %c2_i32 : i32
    %23 = arith.index_cast %22 : i32 to index
    %24 = memref.load %arg1[%23] : memref<10xi32, #tpu.memory_space<smem>>
    %25 = arith.index_cast %24 : i32 to index
    %c0_10 = arith.constant 0 : index
    %c0_11 = arith.constant 0 : index
    %26 = vector.load %arg4[%25, %c0_10, %c0_11] : memref<10x3x128xf32, #tpu.memory_space<vmem>>, vector<1x3x128xf32>
    %27 = vector.shape_cast %26 : vector<1x3x128xf32> to vector<3x128xf32>
    %c0_12 = arith.constant 0 : index
    %c2 = arith.constant 2 : index
    %c0_13 = arith.constant 0 : index
    %28 = vector.load %arg3[%c0_12, %c2, %c0_13] : memref<3x10x128xf32, #tpu.memory_space<vmem>>, vector<3x1x128xf32>
    %29 = vector.shape_cast %28 : vector<3x1x128xf32> to vector<3x128xf32>
    %30 = vector.shape_cast %27 : vector<3x128xf32> to vector<3x1x128xf32>
    tpu.vector_store %arg3[%c0_12, %c2, %c0_13], %30 {strides = array<i32>} : memref<3x10x128xf32, #tpu.memory_space<vmem>>, vector<3x1x128xf32>,
    %c3_i32 = arith.constant 3 : i32
    %31 = arith.addi %3, %c3_i32 : i32
    %32 = arith.index_cast %31 : i32 to index
    %33 = memref.load %arg1[%32] : memref<10xi32, #tpu.memory_space<smem>>
    %34 = arith.index_cast %33 : i32 to index
    %c0_14 = arith.constant 0 : index
    %c0_15 = arith.constant 0 : index
    %35 = vector.load %arg4[%34, %c0_14, %c0_15] : memref<10x3x128xf32, #tpu.memory_space<vmem>>, vector<1x3x128xf32>
    %36 = vector.shape_cast %35 : vector<1x3x128xf32> to vector<3x128xf32>
    %c0_16 = arith.constant 0 : index
    %c3 = arith.constant 3 : index
    %c0_17 = arith.constant 0 : index
    %37 = vector.load %arg3[%c0_16, %c3, %c0_17] : memref<3x10x128xf32, #tpu.memory_space<vmem>>, vector<3x1x128xf32>
    %38 = vector.shape_cast %37 : vector<3x1x128xf32> to vector<3x128xf32>
    %39 = vector.shape_cast %36 : vector<3x128xf32> to vector<3x1x128xf32>
    tpu.vector_store %arg3[%c0_16, %c3, %c0_17], %39 {strides = array<i32>} : memref<3x10x128xf32, #tpu.memory_space<vmem>>, vector<3x1x128xf32>,
    %c4_i32 = arith.constant 4 : i32
    %40 = arith.addi %3, %c4_i32 : i32
    %41 = arith.index_cast %40 : i32 to index
    %42 = memref.load %arg1[%41] : memref<10xi32, #tpu.memory_space<smem>>
    %43 = arith.index_cast %42 : i32 to index
    %c0_18 = arith.constant 0 : index
    %c0_19 = arith.constant 0 : index
    %44 = vector.load %arg4[%43, %c0_18, %c0_19] : memref<10x3x128xf32, #tpu.memory_space<vmem>>, vector<1x3x128xf32>
    %45 = vector.shape_cast %44 : vector<1x3x128xf32> to vector<3x128xf32>
    %c0_20 = arith.constant 0 : index
    %c4 = arith.constant 4 : index
    %c0_21 = arith.constant 0 : index
    %46 = vector.load %arg3[%c0_20, %c4, %c0_21] : memref<3x10x128xf32, #tpu.memory_space<vmem>>, vector<3x1x128xf32>
    %47 = vector.shape_cast %46 : vector<3x1x128xf32> to vector<3x128xf32>
    %48 = vector.shape_cast %45 : vector<3x128xf32> to vector<3x1x128xf32>
    tpu.vector_store %arg3[%c0_20, %c4, %c0_21], %48 {strides = array<i32>} : memref<3x10x128xf32, #tpu.memory_space<vmem>>, vector<3x1x128xf32>,
    %c5_i32 = arith.constant 5 : i32
    %49 = arith.addi %3, %c5_i32 : i32
    %50 = arith.index_cast %49 : i32 to index
    %51 = memref.load %arg1[%50] : memref<10xi32, #tpu.memory_space<smem>>
    %52 = arith.index_cast %51 : i32 to index
    %c0_22 = arith.constant 0 : index
    %c0_23 = arith.constant 0 : index
    %53 = vector.load %arg4[%52, %c0_22, %c0_23] : memref<10x3x128xf32, #tpu.memory_space<vmem>>, vector<1x3x128xf32>
    %54 = vector.shape_cast %53 : vector<1x3x128xf32> to vector<3x128xf32>
    %c0_24 = arith.constant 0 : index
    %c5 = arith.constant 5 : index
    %c0_25 = arith.constant 0 : index
    %55 = vector.load %arg3[%c0_24, %c5, %c0_25] : memref<3x10x128xf32, #tpu.memory_space<vmem>>, vector<3x1x128xf32>
    %56 = vector.shape_cast %55 : vector<3x1x128xf32> to vector<3x128xf32>
    %57 = vector.shape_cast %54 : vector<3x128xf32> to vector<3x1x128xf32>
    tpu.vector_store %arg3[%c0_24, %c5, %c0_25], %57 {strides = array<i32>} : memref<3x10x128xf32, #tpu.memory_space<vmem>>, vector<3x1x128xf32>,
    %c6_i32 = arith.constant 6 : i32
    %58 = arith.addi %3, %c6_i32 : i32
    %59 = arith.index_cast %58 : i32 to index
    %60 = memref.load %arg1[%59] : memref<10xi32, #tpu.memory_space<smem>>
    %61 = arith.index_cast %60 : i32 to index
    %c0_26 = arith.constant 0 : index
    %c0_27 = arith.constant 0 : index
    %62 = vector.load %arg4[%61, %c0_26, %c0_27] : memref<10x3x128xf32, #tpu.memory_space<vmem>>, vector<1x3x128xf32>
    %63 = vector.shape_cast %62 : vector<1x3x128xf32> to vector<3x128xf32>
    %c0_28 = arith.constant 0 : index
    %c6 = arith.constant 6 : index
    %c0_29 = arith.constant 0 : index
    %64 = vector.load %arg3[%c0_28, %c6, %c0_29] : memref<3x10x128xf32, #tpu.memory_space<vmem>>, vector<3x1x128xf32>
    %65 = vector.shape_cast %64 : vector<3x1x128xf32> to vector<3x128xf32>
    %66 = vector.shape_cast %63 : vector<3x128xf32> to vector<3x1x128xf32>
    tpu.vector_store %arg3[%c0_28, %c6, %c0_29], %66 {strides = array<i32>} : memref<3x10x128xf32, #tpu.memory_space<vmem>>, vector<3x1x128xf32>,
    %c7_i32 = arith.constant 7 : i32
    %67 = arith.addi %3, %c7_i32 : i32
    %68 = arith.index_cast %67 : i32 to index
    %69 = memref.load %arg1[%68] : memref<10xi32, #tpu.memory_space<smem>>
    %70 = arith.index_cast %69 : i32 to index
    %c0_30 = arith.constant 0 : index
    %c0_31 = arith.constant 0 : index
    %71 = vector.load %arg4[%70, %c0_30, %c0_31] : memref<10x3x128xf32, #tpu.memory_space<vmem>>, vector<1x3x128xf32>
    %72 = vector.shape_cast %71 : vector<1x3x128xf32> to vector<3x128xf32>
    %c0_32 = arith.constant 0 : index
    %c7 = arith.constant 7 : index
    %c0_33 = arith.constant 0 : index
    %73 = vector.load %arg3[%c0_32, %c7, %c0_33] : memref<3x10x128xf32, #tpu.memory_space<vmem>>, vector<3x1x128xf32>
    %74 = vector.shape_cast %73 : vector<3x1x128xf32> to vector<3x128xf32>
    %75 = vector.shape_cast %72 : vector<3x128xf32> to vector<3x1x128xf32>
    tpu.vector_store %arg3[%c0_32, %c7, %c0_33], %75 {strides = array<i32>} : memref<3x10x128xf32, #tpu.memory_space<vmem>>, vector<3x1x128xf32>,
    %c8_i32 = arith.constant 8 : i32
    %76 = arith.addi %3, %c8_i32 : i32
    %77 = arith.index_cast %76 : i32 to index
    %78 = memref.load %arg1[%77] : memref<10xi32, #tpu.memory_space<smem>>
    %79 = arith.index_cast %78 : i32 to index
    %c0_34 = arith.constant 0 : index
    %c0_35 = arith.constant 0 : index
    %80 = vector.load %arg4[%79, %c0_34, %c0_35] : memref<10x3x128xf32, #tpu.memory_space<vmem>>, vector<1x3x128xf32>
    %81 = vector.shape_cast %80 : vector<1x3x128xf32> to vector<3x128xf32>
    %c0_36 = arith.constant 0 : index
    %c8 = arith.constant 8 : index
    %c0_37 = arith.constant 0 : index
    %82 = vector.load %arg3[%c0_36, %c8, %c0_37] : memref<3x10x128xf32, #tpu.memory_space<vmem>>, vector<3x1x128xf32>
    %83 = vector.shape_cast %82 : vector<3x1x128xf32> to vector<3x128xf32>
    %84 = vector.shape_cast %81 : vector<3x128xf32> to vector<3x1x128xf32>
    tpu.vector_store %arg3[%c0_36, %c8, %c0_37], %84 {strides = array<i32>} : memref<3x10x128xf32, #tpu.memory_space<vmem>>, vector<3x1x128xf32>,
    %c9_i32 = arith.constant 9 : i32
    %85 = arith.addi %3, %c9_i32 : i32
    %86 = arith.index_cast %85 : i32 to index
    %87 = memref.load %arg1[%86] : memref<10xi32, #tpu.memory_space<smem>>
    %88 = arith.index_cast %87 : i32 to index
    %c0_38 = arith.constant 0 : index
    %c0_39 = arith.constant 0 : index
    %89 = vector.load %arg4[%88, %c0_38, %c0_39] : memref<10x3x128xf32, #tpu.memory_space<vmem>>, vector<1x3x128xf32>
    %90 = vector.shape_cast %89 : vector<1x3x128xf32> to vector<3x128xf32>
    %c0_40 = arith.constant 0 : index
    %c9 = arith.constant 9 : index
    %c0_41 = arith.constant 0 : index
    %91 = vector.load %arg3[%c0_40, %c9, %c0_41] : memref<3x10x128xf32, #tpu.memory_space<vmem>>, vector<3x1x128xf32>
    %92 = vector.shape_cast %91 : vector<3x1x128xf32> to vector<3x128xf32>
    %93 = vector.shape_cast %90 : vector<3x128xf32> to vector<3x1x128xf32>
    tpu.vector_store %arg3[%c0_40, %c9, %c0_41], %93 {strides = array<i32>} : memref<3x10x128xf32, #tpu.memory_space<vmem>>, vector<3x1x128xf32>,
    return
  }
  func.func @transform_1(%arg0: i32, %arg1: memref<10xi32, #tpu.memory_space<smem>>) -> (i32, i32, i32) {
    %c0_i32 = arith.constant 0 : i32
    %c0_i32_0 = arith.constant 0 : i32
    %c0_i32_1 = arith.constant 0 : i32
    return %c0_i32, %arg0, %c0_i32_0 : i32, i32, i32
  }
}

</mosaic_0001>

<llo_original>
// kernel: tpu_custom_call.1
$region0: #{tpu_custom_call.1}
  #allocation0 [shape = 'u32[]', space=smem, size = 0x4, offset = 0x4, fixed_abs, tag = 'smem constant byte address 0x4 - core index']
  #allocation1 [shape = 'u32[144,128]{1,0:T(1,128)}', space=vmem, size = 0x12000, scoped, tag = 'internal scratch']
  #allocation2 [shape = 'f32[10,3,128]{2,1,0:T(4,128)}', space=vmem, size = 0x5000, scoped, tag = 'scratch operand']
  #allocation3 [shape = 's32[1]{0}', space=sflag, size = 0x4, scoped, tag = 'scratch operand']
  #allocation4 [shape = 's32[1]{0}', space=sflag, size = 0x4, scoped, tag = 'scoped memory for tpu_custom_call.1']
  #allocation5 [shape = 'u8[512]{0}', space=smem, size = 0x200, scoped, tag = 'prefetched SMEM operand 0']
  #allocation6 [shape = 's32[]', space=sflag, size = 0x4, offset = 0, fixed_abs, tag = 'sflag constant byte address 0x0 - dummy sync flag']
  %s0 = inlined_call_operand.hbm [shape: s32[10], index: 0, kind: input, shape index: {}]
  %s1 = inlined_call_operand.hbm [shape: f32[10,3,128], index: 1, kind: input, shape index: {}]
  %s2 = inlined_call_operand.vmem [shape: f32[3,10,128], index: 2, kind: output, shape index: {}]
  %s3 = sld [smem:[#allocation0]]
  $region14: #{tpu_custom_call.1} parent=0
    _
  %s5 = ssub.s32 1, %s3
  %s6 = scalar_select 0, %s5, %s3
  %8 = dma.hbm_to_smem %s0, 16, [#allocation5], [#allocation4]
  %9 = dma.done [#allocation4], 16
  %10 = sfence
  %p11 = scmp.eq.s32.totalorder 0, 0
  // Predicated region
  $region2: #{tpu_custom_call.1} parent=0 // pred_check
    %p12 = pneg %p11
  $region3: #{tpu_custom_call.1} parent=0 // pred_check_branch
    %14 = sbr.rel (%p12) target = $region5
  $region4: #{tpu_custom_call.1} parent=0 // pred_region
    %s16 = sshll.u32 [#allocation2], 4
    %s17 = int_to_ptr.vmem [resolvable:$true] %s16
    %19 = dma.hbm_to_vmem [thread:$0]  %s1, 480, %s17, [#allocation3], 64, 64, 3
    %s20 = smul.u32 10, 3
    %s21 = smul.u32 %s20, 1
    %s22 = sshll.u32 %s21, 4
    %23 = dma.done [#allocation3], %s22
  $region5: #{tpu_custom_call.1} parent=0 // pred_fallthru
    _
  %s24 = smul.u32 0, 10
  %s25 = sld [smem:[#allocation5 + %s24]]
  %s26 = smul.u32 %s25, 4
  %s27 = scalar_lea.vmem [#allocation2], %s26
  %v28 = vld [vmem:[%s27] sm:$0x7]
  %v31 = vunpack.c.l.s4 1966171168
  %v32 = vunpack.c.0.s8 %v31
  %v33 = vlaneseq
  %v34 = vshrl.u32 %v33, 7
  %v35 = vsub.s32 %v32, %v34
  %v36 = vrot.slane %v28, %v35
  %v37 = vcombine.high %v36, %v36
  %v39 = vunpack.c.l.s4 1966171168
  %v40 = vunpack.c.0.s8 %v39
  %v41 = vlaneseq
  %v42 = vshrl.u32 %v41, 7
  %v43 = vsub.s32 %v40, %v42
  %v44 = vrot.slane %v36, %v43
  %v46 = vunpack.c.l.s4 1966171168
  %v47 = vunpack.c.0.s8 %v46
  %v48 = vlaneseq
  %v49 = vshrl.u32 %v48, 7
  %v50 = vsub.s32 %v47, %v49
  %v51 = vrot.slane %v37, %v50
  %v52 = vcombine.high %v44, %v44
  %56 = vst [vmem:[%s2] sm:$0x1] %v44
  %57 = vst [vmem:[%s2 + $0x10] sm:$0x1] %v51
  %58 = vst [vmem:[%s2 + $0x20] sm:$0x1] %v52
  %s59 = sadd.s32 %s24, 1
  %s60 = sld [smem:[#allocation5 + %s59]]
  %s61 = smul.u32 %s60, 4
  %s62 = scalar_lea.vmem [#allocation2], %s61
  %v63 = vld [vmem:[%s62] sm:$0x7]
  %v66 = vunpack.c.l.s4 1966171168
  %v67 = vunpack.c.0.s8 %v66
  %v68 = vlaneseq
  %v69 = vshrl.u32 %v68, 7
  %v70 = vsub.s32 %v67, %v69
  %v71 = vrot.slane %v63, %v70
  %v72 = vcombine.high %v71, %v71
  %v74 = vunpack.c.l.s4 1966171168
  %v75 = vunpack.c.0.s8 %v74
  %v76 = vlaneseq
  %v77 = vshrl.u32 %v76, 7
  %v78 = vsub.s32 %v75, %v77
  %v79 = vrot.slane %v71, %v78
  %v81 = vunpack.c.l.s4 1966171168
  %v82 = vunpack.c.0.s8 %v81
  %v83 = vlaneseq
  %v84 = vshrl.u32 %v83, 7
  %v85 = vsub.s32 %v82, %v84
  %v86 = vrot.slane %v72, %v85
  %v87 = vcombine.high %v79, %v79
  %91 = vst [vmem:[%s2 + $0x1] sm:$0x1] %v79
  %92 = vst [vmem:[%s2 + $0x11] sm:$0x1] %v86
  %93 = vst [vmem:[%s2 + $0x21] sm:$0x1] %v87
  %s94 = sadd.s32 %s24, 2
  %s95 = sld [smem:[#allocation5 + %s94]]
  %s96 = smul.u32 %s95, 4
  %s97 = scalar_lea.vmem [#allocation2], %s96
  %v98 = vld [vmem:[%s97] sm:$0x7]
  %v101 = vunpack.c.l.s4 1966171168
  %v102 = vunpack.c.0.s8 %v101
  %v103 = vlaneseq
  %v104 = vshrl.u32 %v103, 7
  %v105 = vsub.s32 %v102, %v104
  %v106 = vrot.slane %v98, %v105
  %v107 = vcombine.high %v106, %v106
  %v109 = vunpack.c.l.s4 1966171168
  %v110 = vunpack.c.0.s8 %v109
  %v111 = vlaneseq
  %v112 = vshrl.u32 %v111, 7
  %v113 = vsub.s32 %v110, %v112
  %v114 = vrot.slane %v106, %v113
  %v116 = vunpack.c.l.s4 1966171168
  %v117 = vunpack.c.0.s8 %v116
  %v118 = vlaneseq
  %v119 = vshrl.u32 %v118, 7
  %v120 = vsub.s32 %v117, %v119
  %v121 = vrot.slane %v107, %v120
  %v122 = vcombine.high %v114, %v114
  %126 = vst [vmem:[%s2 + $0x2] sm:$0x1] %v114
  %127 = vst [vmem:[%s2 + $0x12] sm:$0x1] %v121
  %128 = vst [vmem:[%s2 + $0x22] sm:$0x1] %v122
  %s129 = sadd.s32 %s24, 3
  %s130 = sld [smem:[#allocation5 + %s129]]
  %s131 = smul.u32 %s130, 4
  %s132 = scalar_lea.vmem [#allocation2], %s131
  %v133 = vld [vmem:[%s132] sm:$0x7]
  %v136 = vunpack.c.l.s4 1966171168
  %v137 = vunpack.c.0.s8 %v136
  %v138 = vlaneseq
  %v139 = vshrl.u32 %v138, 7
  %v140 = vsub.s32 %v137, %v139
  %v141 = vrot.slane %v133, %v140
  %v142 = vcombine.high %v141, %v141
  %v144 = vunpack.c.l.s4 1966171168
  %v145 = vunpack.c.0.s8 %v144
  %v146 = vlaneseq
  %v147 = vshrl.u32 %v146, 7
  %v148 = vsub.s32 %v145, %v147
  %v149 = vrot.slane %v141, %v148
  %v151 = vunpack.c.l.s4 1966171168
  %v152 = vunpack.c.0.s8 %v151
  %v153 = vlaneseq
  %v154 = vshrl.u32 %v153, 7
  %v155 = vsub.s32 %v152, %v154
  %v156 = vrot.slane %v142, %v155
  %v157 = vcombine.high %v149, %v149
  %161 = vst [vmem:[%s2 + $0x3] sm:$0x1] %v149
  %162 = vst [vmem:[%s2 + $0x13] sm:$0x1] %v156
  %163 = vst [vmem:[%s2 + $0x23] sm:$0x1] %v157
  %s164 = sadd.s32 %s24, 4
  %s165 = sld [smem:[#allocation5 + %s164]]
  %s166 = smul.u32 %s165, 4
  %s167 = scalar_lea.vmem [#allocation2], %s166
  %v168 = vld [vmem:[%s167] sm:$0x7]
  %v171 = vunpack.c.l.s4 1966171168
  %v172 = vunpack.c.0.s8 %v171
  %v173 = vlaneseq
  %v174 = vshrl.u32 %v173, 7
  %v175 = vsub.s32 %v172, %v174
  %v176 = vrot.slane %v168, %v175
  %v177 = vcombine.high %v176, %v176
  %v179 = vunpack.c.l.s4 1966171168
  %v180 = vunpack.c.0.s8 %v179
  %v181 = vlaneseq
  %v182 = vshrl.u32 %v181, 7
  %v183 = vsub.s32 %v180, %v182
  %v184 = vrot.slane %v176, %v183
  %v186 = vunpack.c.l.s4 1966171168
  %v187 = vunpack.c.0.s8 %v186
  %v188 = vlaneseq
  %v189 = vshrl.u32 %v188, 7
  %v190 = vsub.s32 %v187, %v189
  %v191 = vrot.slane %v177, %v190
  %v192 = vcombine.high %v184, %v184
  %196 = vst [vmem:[%s2 + $0x4] sm:$0x1] %v184
  %197 = vst [vmem:[%s2 + $0x14] sm:$0x1] %v191
  %198 = vst [vmem:[%s2 + $0x24] sm:$0x1] %v192
  %s199 = sadd.s32 %s24, 5
  %s200 = sld [smem:[#allocation5 + %s199]]
  %s201 = smul.u32 %s200, 4
  %s202 = scalar_lea.vmem [#allocation2], %s201
  %v203 = vld [vmem:[%s202] sm:$0x7]
  %v206 = vunpack.c.l.s4 1966171168
  %v207 = vunpack.c.0.s8 %v206
  %v208 = vlaneseq
  %v209 = vshrl.u32 %v208, 7
  %v210 = vsub.s32 %v207, %v209
  %v211 = vrot.slane %v203, %v210
  %v212 = vcombine.high %v211, %v211
  %v214 = vunpack.c.l.s4 1966171168
  %v215 = vunpack.c.0.s8 %v214
  %v216 = vlaneseq
  %v217 = vshrl.u32 %v216, 7
  %v218 = vsub.s32 %v215, %v217
  %v219 = vrot.slane %v211, %v218
  %v221 = vunpack.c.l.s4 1966171168
  %v222 = vunpack.c.0.s8 %v221
  %v223 = vlaneseq
  %v224 = vshrl.u32 %v223, 7
  %v225 = vsub.s32 %v222, %v224
  %v226 = vrot.slane %v212, %v225
  %v227 = vcombine.high %v219, %v219
  %231 = vst [vmem:[%s2 + $0x5] sm:$0x1] %v219
  %232 = vst [vmem:[%s2 + $0x15] sm:$0x1] %v226
  %233 = vst [vmem:[%s2 + $0x25] sm:$0x1] %v227
  %s234 = sadd.s32 %s24, 6
  %s235 = sld [smem:[#allocation5 + %s234]]
  %s236 = smul.u32 %s235, 4
  %s237 = scalar_lea.vmem [#allocation2], %s236
  %v238 = vld [vmem:[%s237] sm:$0x7]
  %v241 = vunpack.c.l.s4 1966171168
  %v242 = vunpack.c.0.s8 %v241
  %v243 = vlaneseq
  %v244 = vshrl.u32 %v243, 7
  %v245 = vsub.s32 %v242, %v244
  %v246 = vrot.slane %v238, %v245
  %v247 = vcombine.high %v246, %v246
  %v249 = vunpack.c.l.s4 1966171168
  %v250 = vunpack.c.0.s8 %v249
  %v251 = vlaneseq
  %v252 = vshrl.u32 %v251, 7
  %v253 = vsub.s32 %v250, %v252
  %v254 = vrot.slane %v246, %v253
  %v256 = vunpack.c.l.s4 1966171168
  %v257 = vunpack.c.0.s8 %v256
  %v258 = vlaneseq
  %v259 = vshrl.u32 %v258, 7
  %v260 = vsub.s32 %v257, %v259
  %v261 = vrot.slane %v247, %v260
  %v262 = vcombine.high %v254, %v254
  %266 = vst [vmem:[%s2 + $0x6] sm:$0x1] %v254
  %267 = vst [vmem:[%s2 + $0x16] sm:$0x1] %v261
  %268 = vst [vmem:[%s2 + $0x26] sm:$0x1] %v262
  %s269 = sadd.s32 %s24, 7
  %s270 = sld [smem:[#allocation5 + %s269]]
  %s271 = smul.u32 %s270, 4
  %s272 = scalar_lea.vmem [#allocation2], %s271
  %v273 = vld [vmem:[%s272] sm:$0x7]
  %v276 = vunpack.c.l.s4 1966171168
  %v277 = vunpack.c.0.s8 %v276
  %v278 = vlaneseq
  %v279 = vshrl.u32 %v278, 7
  %v280 = vsub.s32 %v277, %v279
  %v281 = vrot.slane %v273, %v280
  %v282 = vcombine.high %v281, %v281
  %v284 = vunpack.c.l.s4 1966171168
  %v285 = vunpack.c.0.s8 %v284
  %v286 = vlaneseq
  %v287 = vshrl.u32 %v286, 7
  %v288 = vsub.s32 %v285, %v287
  %v289 = vrot.slane %v281, %v288
  %v291 = vunpack.c.l.s4 1966171168
  %v292 = vunpack.c.0.s8 %v291
  %v293 = vlaneseq
  %v294 = vshrl.u32 %v293, 7
  %v295 = vsub.s32 %v292, %v294
  %v296 = vrot.slane %v282, %v295
  %v297 = vcombine.high %v289, %v289
  %301 = vst [vmem:[%s2 + $0x7] sm:$0x1] %v289
  %302 = vst [vmem:[%s2 + $0x17] sm:$0x1] %v296
  %303 = vst [vmem:[%s2 + $0x27] sm:$0x1] %v297
  %s304 = sadd.s32 %s24, 8
  %s305 = sld [smem:[#allocation5 + %s304]]
  %s306 = smul.u32 %s305, 4
  %s307 = scalar_lea.vmem [#allocation2], %s306
  %v308 = vld [vmem:[%s307] sm:$0x7]
  %v311 = vunpack.c.l.s4 1966171168
  %v312 = vunpack.c.0.s8 %v311
  %v313 = vlaneseq
  %v314 = vshrl.u32 %v313, 7
  %v315 = vsub.s32 %v312, %v314
  %v316 = vrot.slane %v308, %v315
  %v317 = vcombine.high %v316, %v316
  %v319 = vunpack.c.l.s4 1966171168
  %v320 = vunpack.c.0.s8 %v319
  %v321 = vlaneseq
  %v322 = vshrl.u32 %v321, 7
  %v323 = vsub.s32 %v320, %v322
  %v324 = vrot.slane %v316, %v323
  %v326 = vunpack.c.l.s4 1966171168
  %v327 = vunpack.c.0.s8 %v326
  %v328 = vlaneseq
  %v329 = vshrl.u32 %v328, 7
  %v330 = vsub.s32 %v327, %v329
  %v331 = vrot.slane %v317, %v330
  %v332 = vcombine.high %v324, %v324
  %336 = vst [vmem:[%s2 + $0x8] sm:$0x1] %v324
  %337 = vst [vmem:[%s2 + $0x18] sm:$0x1] %v331
  %338 = vst [vmem:[%s2 + $0x28] sm:$0x1] %v332
  %s339 = sadd.s32 %s24, 9
  %s340 = sld [smem:[#allocation5 + %s339]]
  %s341 = smul.u32 %s340, 4
  %s342 = scalar_lea.vmem [#allocation2], %s341
  %v343 = vld [vmem:[%s342] sm:$0x7]
  %v346 = vunpack.c.l.s4 1966171168
  %v347 = vunpack.c.0.s8 %v346
  %v348 = vlaneseq
  %v349 = vshrl.u32 %v348, 7
  %v350 = vsub.s32 %v347, %v349
  %v351 = vrot.slane %v343, %v350
  %v352 = vcombine.high %v351, %v351
  %v354 = vunpack.c.l.s4 1966171168
  %v355 = vunpack.c.0.s8 %v354
  %v356 = vlaneseq
  %v357 = vshrl.u32 %v356, 7
  %v358 = vsub.s32 %v355, %v357
  %v359 = vrot.slane %v351, %v358
  %v361 = vunpack.c.l.s4 1966171168
  %v362 = vunpack.c.0.s8 %v361
  %v363 = vlaneseq
  %v364 = vshrl.u32 %v363, 7
  %v365 = vsub.s32 %v362, %v364
  %v366 = vrot.slane %v352, %v365
  %v367 = vcombine.high %v359, %v359
  %371 = vst [vmem:[%s2 + $0x9] sm:$0x1] %v359
  %372 = vst [vmem:[%s2 + $0x19] sm:$0x1] %v366
  %373 = vst [vmem:[%s2 + $0x29] sm:$0x1] %v367
  // Predicated region
  $region6: #{tpu_custom_call.1} parent=0 // pred_check
    _
  $region7: #{tpu_custom_call.1} parent=0 // pred_check_branch
    %375 = sbr.rel (0) target = $region9
  $region8: #{tpu_custom_call.1} parent=0 // pred_region
    _
  $region9: #{tpu_custom_call.1} parent=0 // pred_fallthru
    _
  // Predicated region
  $region10: #{tpu_custom_call.1} parent=0 // pred_check
    _
  $region11: #{tpu_custom_call.1} parent=0 // pred_check_branch
    %377 = sbr.rel (0) target = $region13
  $region12: #{tpu_custom_call.1} parent=0 // pred_region
    _
  $region13: #{tpu_custom_call.1} parent=0 // pred_fallthru
    _
  %378 = vsyncmov [#allocation3]
  %s379 = vpop.sfrf %378
  %p380 = scmp.eq.s32.totalorder %s379, 0
  %p381 = pneg %p380
  %383 = shalt.err (%p381)

</llo_original>
